<compile_context>
chip_gen: v6e
topology: v6e:2x2x1
jax: 0.10.0
libtpu: 0.0.40
codegen_flags: <defaults>
</compile_context>

<pallas_src>
import math
from functools import lru_cache

import jax
import jax.numpy as jnp
from jax.experimental import pallas as pl
from jax.experimental.pallas import tpu as pltpu


def signed_minmax(bit):
    Qn = -(2 ** (bit - 1))
    Qp = 2 ** (bit - 1) - 1
    return Qn, Qp


# ----------------------------------------------------------------------------
# Pallas kernel: global abs-max reduction (the observer hot path)
# ----------------------------------------------------------------------------
_LANES = 128
# Native sublane multiple per element size (packed dtypes tile sublanes 2x/4x).
_SUBLANE_MULT = {4: 8, 2: 16, 1: 32}


@lru_cache(maxsize=None)
def _tpu_kind() -> str:
    """Best-effort device-kind probe (only used for tile-size / split hints)."""
    try:
        return jax.devices()[0].device_kind.lower()
    except Exception:
        return ""


def _make_absmax_kernel(tile_rows, sub, tiles_per_split, num_tiles, rows,
                        need_mask):
    """Kernel: fold one (tile_rows, 128) input tile into a (sub, 128) f32
    per-split max accumulator.  The accumulator's block index depends only on
    the parallel (split) axis, so it stays VMEM-resident across the inner
    "arbitrary" reduction axis."""

    def kernel(x_ref, o_ref):
        @pl.when(pl.program_id(1) == 0)
        def _():
            # |x| >= 0, so 0 is a safe identity for the running max.
            # (Float-only path; NaNs still propagate through jnp.maximum.)
            o_ref[...] = jnp.zeros_like(o_ref)

        a = jnp.abs(x_ref[...])                       # native dtype (bf16 ok)

        if need_mask:
            # The last tile along the reduction axis overhangs the array; its
            # out-of-bounds rows hold unspecified data -> mask them to 0.
            # tile_idx must mirror the clamped input index_map exactly.
            tile_idx = jnp.minimum(
                pl.program_id(0) * tiles_per_split + pl.program_id(1),
                num_tiles - 1)
            row_ids = (jax.lax.broadcasted_iota(jnp.int32,
                                                (tile_rows, _LANES), 0)
                       + tile_idx * tile_rows)
            a = jnp.where(row_ids < rows, a, jnp.zeros_like(a))

        # Pure-VPU fold of the tile down to one (sub, 128) slab: the grouping
        # follows the native sublane tiling, so the reshape does not cross
        # packed-tile boundaries and no XLU work is generated.
        folded = jnp.max(a.reshape(tile_rows // sub, sub, _LANES), axis=0)
        o_ref[...] = jnp.maximum(o_ref[...], folded.astype(jnp.float32))

    return kernel


def pallas_absmax(x: jax.Array) -> jax.Array:
    """max(|x|) over all elements of x, as an f32 scalar (Pallas hot path)."""
    # The observer is float-only in the PyTorch reference; route anything
    # exotic (ints would overflow abs(int8 -128); f64 unsupported) via f32.
    if x.dtype not in (jnp.float32, jnp.bfloat16, jnp.float16):
        x = x.astype(jnp.float32)

    flat = jnp.ravel(x)
    n = flat.shape[0]
    if n == 0:                                    # degenerate-input guard
        return jnp.float32(0.0)

    itemsize = flat.dtype.itemsize
    sub = _SUBLANE_MULT.get(itemsize, 8)
    rows = n // _LANES                            # full 128-lane rows
    rem = n - rows * _LANES                       # <128-element remainder

    if rows < sub:
        # Fewer elements than one native tile: a kernel launch isn't worth it.
        return jnp.max(jnp.abs(flat)).astype(jnp.float32)

    kind = _tpu_kind()
    is_v7x = ("v7" in kind) or ("tpu7" in kind)

    # Constant-BYTE tiles (not constant rows) keep every dtype at >=85% of the
    # HBM roofline: ~2 MiB/step generally, 4 MiB/step on v7x whose per-TC HBM
    # bandwidth makes 512 KiB steps overhead-dominated.  Double-buffered input
    # (2 x tile) plus the tiny accumulator fits v5e's 16 MiB scoped-VMEM
    # default with headroom, so no vmem_limit_bytes override is needed.
    target_bytes = (4 << 20) if is_v7x else (2 << 20)
    tile_rows = max(sub, (target_bytes // (_LANES * itemsize)) // sub * sub)
    tile_rows = min(tile_rows, (rows // sub) * sub)

    num_tiles = pl.cdiv(rows, tile_rows)
    # Shard the row range across TensorCores only where there are two (v7x);
    # on single-TC v5e/v6e a second split is just serial redundant work.
    num_splits = 2 if (is_v7x and num_tiles >= 2) else 1
    tiles_per_split = pl.cdiv(num_tiles, num_splits)
    need_mask = (rows % tile_rows) != 0

    # Identity slice when n is a multiple of 128 (the common case); all full
    # 128-lane rows go through the kernel, so at most 127 elements are left to
    # the plain-JAX tail below (no full-array slice copy for ragged sizes).
    main = flat[:rows * _LANES].reshape(rows, _LANES)

    def in_map(p, i, tps=tiles_per_split, nt=num_tiles):
        # Clamp so padding iterations of an uneven split re-read the last
        # tile: idempotent for max (do NOT reuse for non-idempotent folds).
        return (jnp.minimum(p * tps + i, nt - 1), 0)

    kernel = _make_absmax_kernel(tile_rows, sub, tiles_per_split, num_tiles,
                                 rows, need_mask)

    out_rows = num_splits * sub
    partial = pl.pallas_call(
        kernel,
        out_shape=jax.ShapeDtypeStruct((out_rows, _LANES), jnp.float32),
        grid_spec=pl.GridSpec(
            grid=(num_splits, tiles_per_split),
            in_specs=[pl.BlockSpec((tile_rows, _LANES), in_map)],
            # Output block index depends only on the parallel axis -> the
            # (sub, 128) accumulator stays VMEM-resident across the reduction.
            out_specs=pl.BlockSpec((sub, _LANES), lambda p, i: (p, 0)),
        ),
        # NOTE(v7x): if a Mosaic dump ever shows the leading axis serialized,
        # switch it to pltpu.CORE_PARALLEL / pl.core_map for guaranteed 2-TC
        # sharding; plain "parallel" is harmless on single-TC v5e/v6e.
        compiler_params=pltpu.CompilerParams(
            dimension_semantics=("parallel", "arbitrary")),
        cost_estimate=pl.CostEstimate(
            flops=2 * rows * _LANES,
            transcendentals=0,
            bytes_accessed=rows * _LANES * itemsize + out_rows * _LANES * 4),
    )(main)

    # Single tiny finalize; XLA fuses the (<=32,128) partial reduction and the
    # <128-element ragged tail into one launch.
    result = jnp.max(partial)
    if rem:
        result = jnp.maximum(
            result,
            jnp.max(jnp.abs(flat[rows * _LANES:]).astype(jnp.float32)))
    return result


# ----------------------------------------------------------------------------
# LSQObserver / _QBase (JAX side, parameter bookkeeping in plain Python/JAX)
# ----------------------------------------------------------------------------
class LSQObserver:
    """JAX port of the PyTorch LSQObserver (mode='minmax' only)."""

    def __init__(self, mode, Qn, Qp, calibrate_count=1, momentum=0.1):
        if mode != "minmax":
            # TODO(synk): 'lsq' / 'lsq+' observers need a nonzero-masked
            # mean/std reduction; only 'minmax' (used by _QBase) is kernelized.
            raise NotImplementedError
        self.mode = mode
        self.Qn = Qn
        self.Qp = Qp
        self.momentum = momentum
        self.calibrate_count = calibrate_count
        self.counter = 0
        self.scale = jnp.float32(0.0)        # Parameter(torch.tensor(0.0))
        self.g = None

    def _scale_func(self, x):
        # minmax observer: max(|x|) / Qp   (Pallas hot path)
        return pallas_absmax(x) / jnp.float32(self.Qp)

    def __call__(self, x):
        # counter/scale/g live as Python/JAX object state mirroring the torch
        # buffers; intended for eager (calibration-time) use, not jax.jit.
        if self.counter < self.calibrate_count:
            if self.counter == 0:
                self.scale = self._scale_func(x)
            else:
                self.scale = (1.0 - self.momentum) * self.scale \
                    + self.momentum * self._scale_func(x)
            self.counter += 1
        if self.g is None:
            self.g = 1.0 / math.sqrt(x.size * self.Qp)
        # grad_scale(scale, g): forward value is exactly `scale` (the detach
        # trick only reroutes the gradient).
        return self.scale


class QBase:
    """JAX port of _QBase (quantizer base; forward is abstract upstream)."""

    def __init__(self, to_bit=8, training=True):
        self.Qn, self.Qp = signed_minmax(to_bit)
        self.to_bit = to_bit
        self.observer = LSQObserver(mode="minmax", Qn=self.Qn, Qp=self.Qp)
        self.training = training

    def set_training(self, set=True):
        self.training = set

    def forward(self, x, scale=None):
        # TODO(synk): abstract in the reference (_QBase.forward raises
        # NotImplementedError); subclasses implement the actual fake-quant.
        raise NotImplementedError


# ----------------------------------------------------------------------------
# main
# ----------------------------------------------------------------------------
if __name__ == "__main__":
    key = jax.random.PRNGKey(0)
    # NCHW activation, as the PyTorch conv quantizers expect.
    x = jax.random.normal(key, (2, 4, 16, 16), dtype=jnp.float32)

    qbase = QBase(to_bit=8, training=True)

    # Observer forward (the only concrete forward path in the module).
    scale = jax.block_until_ready(qbase.observer(x))
    ref_scale = jnp.max(jnp.abs(x)) / qbase.Qp
    assert jnp.allclose(scale, ref_scale, rtol=1e-6, atol=1e-6), (scale, ref_scale)

    # Calling again must not recalibrate (counter == calibrate_count).
    scale2 = jax.block_until_ready(qbase.observer(x))
    assert jnp.allclose(scale2, scale)

    # Also exercise the ragged / masked-last-tile / bf16 kernel path directly.
    y = jax.random.normal(jax.random.PRNGKey(1), (3, 11, 9, 9),
                          dtype=jnp.bfloat16)
    got = jax.block_until_ready(pallas_absmax(y))
    ref = jnp.max(jnp.abs(y.astype(jnp.float32)))
    assert jnp.allclose(got, ref, rtol=1e-6, atol=1e-6), (got, ref)

    print("KERNEL_OK")
</pallas_src>

<mosaic_0001>
module attributes {stable_mosaic.version = 11 : i64} {
  func.func @kernel(%arg0: i32, %arg1: i32, %arg2: memref<16x128xf32, #tpu.memory_space<vmem>>, %arg3: memref<8x128xf32, #tpu.memory_space<vmem>>) attributes {dimension_semantics = [#tpu.dimension_semantics<parallel>, #tpu.dimension_semantics<arbitrary>], iteration_bounds = array<i64: 1, 1>, scalar_prefetch = 0 : i64, scratch_operands = 0 : i64, tpu.core_type = #tpu.core_type<tc>, window_params = [{transform_indices = @transform_0, window_bounds = array<i64: 16, 128>}, {transform_indices = @transform_1, window_bounds = array<i64: 8, 128>}]} {
    %c0_i32 = arith.constant 0 : i32
    %0 = arith.cmpi eq, %arg1, %c0_i32 : i32
    %1 = arith.extui %0 : i1 to i32
    %c0_i32_0 = arith.constant 0 : i32
    %2 = arith.cmpi ne, %1, %c0_i32_0 : i32
    scf.if %2 {
      %cst_6 = arith.constant 0.000000e+00 : f32
      %10 = vector.broadcast %cst_6 : f32 to vector<8x128xf32>
      %c0_7 = arith.constant 0 : index
      %c0_8 = arith.constant 0 : index
      %11 = vector.load %arg3[%c0_7, %c0_8] : memref<8x128xf32, #tpu.memory_space<vmem>>, vector<8x128xf32>
      tpu.vector_store %arg3[%c0_7, %c0_8], %10 {strides = array<i32>} : memref<8x128xf32, #tpu.memory_space<vmem>>, vector<8x128xf32>,
    } else {
    }
    %c0 = arith.constant 0 : index
    %c0_1 = arith.constant 0 : index
    %3 = vector.load %arg2[%c0, %c0_1] : memref<16x128xf32, #tpu.memory_space<vmem>>, vector<16x128xf32>
    %4 = math.absf %3 : vector<16x128xf32>
    %5 = vector.shape_cast %4 : vector<16x128xf32> to vector<2x8x128xf32>
    %cst = arith.constant dense<0xFF800000> : vector<8x128xf32>
    %6 = vector.multi_reduction <maximumf>, %5, %cst [0] : vector<2x8x128xf32> to vector<8x128xf32>
    %c0_2 = arith.constant 0 : index
    %c0_3 = arith.constant 0 : index
    %7 = vector.load %arg3[%c0_2, %c0_3] : memref<8x128xf32, #tpu.memory_space<vmem>>, vector<8x128xf32>
    %8 = arith.maximumf %7, %6 : vector<8x128xf32>
    %c0_4 = arith.constant 0 : index
    %c0_5 = arith.constant 0 : index
    %9 = vector.load %arg3[%c0_4, %c0_5] : memref<8x128xf32, #tpu.memory_space<vmem>>, vector<8x128xf32>
    tpu.vector_store %arg3[%c0_4, %c0_5], %8 {strides = array<i32>} : memref<8x128xf32, #tpu.memory_space<vmem>>, vector<8x128xf32>,
    return
  }
  func.func @transform_0(%arg0: i32, %arg1: i32) -> (i32, i32) {
    %c1_i32 = arith.constant 1 : i32
    %0 = arith.muli %arg0, %c1_i32 : i32
    %1 = arith.addi %0, %arg1 : i32
    %c0_i32 = arith.constant 0 : i32
    %2 = arith.minsi %1, %c0_i32 : i32
    %c0_i32_0 = arith.constant 0 : i32
    %c0_i32_1 = arith.constant 0 : i32
    return %2, %c0_i32_0 : i32, i32
  }
  func.func @transform_1(%arg0: i32, %arg1: i32) -> (i32, i32) {
    %c0_i32 = arith.constant 0 : i32
    %c0_i32_0 = arith.constant 0 : i32
    return %arg0, %c0_i32 : i32, i32
  }
}

</mosaic_0001>

<llo_original>
// kernel: tpu_custom_call.1
$region0: #{tpu_custom_call.1}
  #allocation0 [shape = 'u32[]', space=smem, size = 0x4, offset = 0x4, fixed_abs, tag = 'smem constant byte address 0x4 - core index']
  #allocation1 [shape = 'u32[144,128]{1,0:T(1,128)}', space=vmem, size = 0x12000, scoped, tag = 'internal scratch']
  %s0 = inlined_call_operand.hbm [shape: f32[16,128], index: 0, kind: input, shape index: {}]
  %s1 = inlined_call_operand.hbm [shape: f32[8,128], index: 1, kind: output, shape index: {}]
  %s2 = sld [smem:[#allocation0]]
  $region22: #{tpu_custom_call.1} parent=0
    _
  %s4 = ssub.s32 1, %s2
  %s5 = scalar_select 0, %s4, %s2
  $region1: #{tpu_custom_call.1} parent=0
    #allocation2 [shape = 'u8[8192]{0}', space=vmem, size = 0x2000, scoped, tag = 'input window, operand 0, single buffered']
    #allocation3 [shape = 's32[1]{0}', space=sflag, size = 0x4, scoped, tag = 'scoped memory for tpu_custom_call.1']
    #allocation4 [shape = 's32[1]{0}', space=sflag, size = 0x4, scoped, tag = 'scoped memory for tpu_custom_call.1']
    #allocation5 [shape = 'u8[4096]{0}', space=vmem, size = 0x1000, scoped, tag = 'output window, operand 0, single buffered']
    %6 = vsyncpa [#allocation3], 0
    %7 = vsyncpa [#allocation4], 0
    // Predicated region
    $region2: #{tpu_custom_call.1} parent=1 // pred_check
      _
    $region3: #{tpu_custom_call.1} parent=1 // pred_check_branch
      %9 = sbr.rel (0) target = $region5
    $region4: #{tpu_custom_call.1} parent=1 // pred_region
      %s10 = sadd.s32 0, 0
      %p11 = scmp.lt.s32.totalorder %s10, 0
      %s12 = scalar_select %p11, %s10, 0
      %s13 = smul.u32 2, %s12
      %s15 = ssub.s32 256, 256
      %16 = vsyncadd [#allocation3], %s15
      %s17 = smul.addr %s13, 128
      %s18 = scalar_lea.hbm %s0, %s17
      %s19 = sshll.u32 [#allocation2], 4
      %s20 = int_to_ptr.vmem [resolvable:$true] %s19
      %25 = dma.hbm_to_vmem [thread:$0]  %s18, 256, %s20, [#allocation3], 128, 128, 8
    $region5: #{tpu_custom_call.1} parent=1 // pred_fallthru
      _
    // Predicated region
    $region6: #{tpu_custom_call.1} parent=1 // pred_check
      _
    $region7: #{tpu_custom_call.1} parent=1 // pred_check_branch
      %27 = sbr.rel (0) target = $region9
    $region8: #{tpu_custom_call.1} parent=1 // pred_region
      %28 = dma.done [#allocation3], 256
    $region9: #{tpu_custom_call.1} parent=1 // pred_fallthru
      _
    %s29 = sadd.s32 0, 0
    %p30 = scmp.lt.s32.totalorder %s29, 0
    %s31 = scalar_select %p30, %s29, 0
    %s32 = smul.u32 2, %s31
    %p33 = scmp.eq.s32.totalorder 0, 0
    // Predicated region
    $region10: #{tpu_custom_call.1} parent=1 // pred_check
      %p34 = pneg %p33
    $region11: #{tpu_custom_call.1} parent=1 // pred_check_branch
      %36 = sbr.rel (%p34) target = $region13
    $region12: #{tpu_custom_call.1} parent=1 // pred_region
      %37 = vst [vmem:[#allocation5] sm:$0xff] 0.0
    $region13: #{tpu_custom_call.1} parent=1 // pred_fallthru
      _
    %v38 = vld [vmem:[#allocation2] sm:$0xff]
    %v39 = vld [vmem:[#allocation2 + $0x8] sm:$0xff]
    %v40 = vand.u32 2147483647, %v38
    %v41 = vand.u32 2147483647, %v39
    %v42 = vmax.f32 %v40, %v41
    %v43 = vld [vmem:[#allocation5] sm:$0xff]
    %v44 = vmax.f32 %v43, %v42
    %45 = vst [vmem:[#allocation5] sm:$0xff] %v44
    // Predicated region
    $region14: #{tpu_custom_call.1} parent=1 // pred_check
      _
    $region15: #{tpu_custom_call.1} parent=1 // pred_check_branch
      %47 = sbr.rel (0) target = $region17
    $region16: #{tpu_custom_call.1} parent=1 // pred_region
      %s49 = ssub.s32 128, 128
      %50 = vsyncadd [#allocation4], %s49
      %s52 = sshll.u32 [#allocation5], 4
      %s53 = int_to_ptr.vmem [resolvable:$true] %s52
      %55 = dma.vmem_to_hbm [thread:$0]  %s53, 128, %s1, [#allocation4]
    $region17: #{tpu_custom_call.1} parent=1 // pred_fallthru
      _
    // Predicated region
    $region18: #{tpu_custom_call.1} parent=1 // pred_check
      _
    $region19: #{tpu_custom_call.1} parent=1 // pred_check_branch
      %57 = sbr.rel (0) target = $region21
    $region20: #{tpu_custom_call.1} parent=1 // pred_region
      %58 = dma.done [#allocation4], 128
    $region21: #{tpu_custom_call.1} parent=1 // pred_fallthru
      _
    %59 = vsyncpa [#allocation3], 1
    %60 = vsyncpa [#allocation4], 1

</llo_original>
